<compile_context>
chip_gen: v5e
topology: v5e:2x2
jax: 0.10.0
libtpu: 0.0.40
codegen_flags: <defaults>
</compile_context>

<pallas_src>
import functools

import jax
import jax.numpy as jnp
from jax.experimental import pallas as pl
from jax.experimental.pallas import tpu as pltpu

LANES = 128            # one 128-lane row = 32 interleaved [l, t, r, b] boxes
MAX_BLOCK_ROWS = 1024  # 1024 x 128 f32 = 512 KiB per operand per grid step


@functools.lru_cache(maxsize=None)
def _roll_shifts():
    """Resolve pltpu.roll's rotation convention once per process.

    Returns (s2, s1) such that pltpu.roll(x, s2, axis=1)[..., j] == x[..., j+2]
    and pltpu.roll(x, s1, axis=1)[..., j] == x[..., j+1], independent of the
    underlying rotate direction.
    """
    def probe(x_ref, o_ref):
        o_ref[...] = pltpu.roll(x_ref[...], shift=LANES - 2, axis=1)

    x = jnp.arange(LANES, dtype=jnp.float32).reshape(1, LANES)
    rolled = pl.pallas_call(
        probe, out_shape=jax.ShapeDtypeStruct((1, LANES), jnp.float32))(x)
    if int(rolled[0, 0]) == 2:        # np.roll convention: out[j] = x[j - s]
        return LANES - 2, LANES - 1
    return 2, 1                       # opposite convention: out[j] = x[j + s]


def _iou_loss_kernel(n_ref, pred_ref, target_ref, *rest, loc_loss_type,
                     block_rows, has_weight, shift2, shift1):
    """One grid step over a (block_rows, 128) slab of interleaved ltrb data."""
    if has_weight:
        w_ref, out_ref = rest
    else:
        (out_ref,) = rest

    i = pl.program_id(0)

    p = pred_ref[...]       # lanes: l0 t0 r0 b0  l1 t1 r1 b1 ...
    t = target_ref[...]

    # Per-lane combos are interleave-agnostic.
    mn = jnp.minimum(p, t)
    mx = jnp.maximum(p, t)

    # De-interleave with lane rotations (XLU slot); only adds/muls hit the VPU.
    def roll2(x):
        return pltpu.roll(x, shift=shift2, axis=1)

    def roll1(x):
        return pltpu.roll(x, shift=shift1, axis=1)

    sum_p = p + roll2(p)        # lane%4==0: l+r          lane%4==1: t+b
    sum_t = t + roll2(t)
    sum_mn = mn + roll2(mn)     # lane%4==0: w_intersect  lane%4==1: h_intersect
    sum_mx = mx + roll2(mx)     # lane%4==0: g_w          lane%4==1: g_h

    pred_area = sum_p * roll1(sum_p)            # valid at lane % 4 == 0
    target_area = sum_t * roll1(sum_t)
    area_intersect = sum_mn * roll1(sum_mn)
    ac_union = sum_mx * roll1(sum_mx)

    area_union = target_area + pred_area - area_intersect
    # Exact divides: no approx-reciprocal drift accumulating in the sum.
    ious = (area_intersect + 1.0) / (area_union + 1.0)

    if loc_loss_type == 'iou':
        losses = -jnp.log(ious)
    elif loc_loss_type == 'linear_iou':
        losses = 1.0 - ious
    elif loc_loss_type == 'giou':
        gious = ious - (ac_union - area_union) / ac_union
        losses = 1.0 - gious
    else:
        raise NotImplementedError(loc_loss_type)

    if has_weight:
        losses = losses * w_ref[...]

    def reduce_store(vals):
        # Per-lane partial sum over the sublane axis -> one lane-dense (1, 128)
        # store per grid step.  Lane columns with lane % 4 != 0 only hold
        # de-interleave byproducts; the wrapper drops them, so no per-step lane
        # masking is needed.
        out_ref[0] = jnp.sum(vals, axis=0, keepdims=True)

    last = pl.num_programs(0) - 1

    @pl.when(i < last)
    def _():
        reduce_store(losses)

    @pl.when(i == last)
    def _():
        # Only the final block can contain padded / out-of-bounds tail data
        # (gIoU padding is 0/0 = NaN).  jnp.where is a true select, so it kills
        # any NaN/Inf coming from that region.
        rows_iota = jax.lax.broadcasted_iota(jnp.int32, (block_rows, LANES), 0)
        lanes_iota = jax.lax.broadcasted_iota(jnp.int32, (block_rows, LANES), 1)
        elem = rows_iota * LANES + lanes_iota
        rem = 4 * n_ref[0] - i * (block_rows * LANES)
        reduce_store(jnp.where(elem < rem, losses, 0.0))


def _as_rows(flat, rows, pad_elems):
    if pad_elems:
        flat = jnp.pad(flat, (0, pad_elems))
    return flat.reshape(rows, LANES)


def iou_loss(pred, target, weight=None, loc_loss_type='iou'):
    """Pallas equivalent of IOULoss.forward (sum-reduced loss).

    Args:
      pred:   (N, 4) float32 predicted (l, t, r, b) distances.
      target: (N, 4) float32 target (l, t, r, b) distances.
      weight: optional (N,) float32 per-instance weight.
      loc_loss_type: 'iou' | 'linear_iou' | 'giou'.
    Returns:
      scalar float32 loss (sum over instances).
    """
    pred = jnp.asarray(pred, jnp.float32)
    target = jnp.asarray(target, jnp.float32)
    n = pred.shape[0]

    elems = 4 * n
    rows = pl.cdiv(elems, LANES)
    pad_elems = rows * LANES - elems   # 0 when n % 32 == 0 -> zero-copy reshape

    if rows <= 8:
        block_rows = rows
    else:
        # ~half the rows so the "parallel" grid has >= 2 steps (v7x has two
        # TensorCores), rounded to a sublane multiple, capped at MAX_BLOCK_ROWS
        # (512 KiB/operand/step amortises the per-step pipeline overhead while
        # staying far inside every chip's VMEM limit).
        block_rows = max(8, min(MAX_BLOCK_ROWS, ((rows + 1) // 2 + 7) // 8 * 8))
    num_blocks = pl.cdiv(rows, block_rows)

    # Native row-major (N, 4) data viewed as 32 interleaved boxes per 128-lane
    # row.  Free bitcast reshape when n % 32 == 0; otherwise one flat pad to
    # the next 128-element boundary is the only copy.
    # TODO(synk): have the upstream producer hand over a 32-box-aligned buffer
    # so the pad copy disappears for every N.
    pred_rows = _as_rows(pred.reshape(-1), rows, pad_elems)
    target_rows = _as_rows(target.reshape(-1), rows, pad_elems)

    has_weight = weight is not None
    shift2, shift1 = _roll_shifts()

    args = [jnp.asarray([n], jnp.int32), pred_rows, target_rows]
    in_specs = [
        pl.BlockSpec((block_rows, LANES), lambda i, n_sref: (i, 0)),
        pl.BlockSpec((block_rows, LANES), lambda i, n_sref: (i, 0)),
    ]
    if has_weight:
        # Weight expanded to the interleaved element layout (16 B/box extra;
        # the dominant pred/target path stays copy-free).
        w4 = jnp.repeat(jnp.asarray(weight, jnp.float32), 4)
        args.append(_as_rows(w4, rows, pad_elems))
        in_specs.append(pl.BlockSpec((block_rows, LANES),
                                     lambda i, n_sref: (i, 0)))

    kernel = functools.partial(
        _iou_loss_kernel,
        loc_loss_type=loc_loss_type,
        block_rows=block_rows,
        has_weight=has_weight,
        shift2=shift2,
        shift1=shift1,
    )

    io_bytes = (2 + int(has_weight)) * rows * LANES * 4 + num_blocks * LANES * 4
    partials = pl.pallas_call(
        kernel,
        out_shape=jax.ShapeDtypeStruct((num_blocks, 1, LANES), jnp.float32),
        grid_spec=pltpu.PrefetchScalarGridSpec(
            num_scalar_prefetch=1,
            grid=(num_blocks,),
            in_specs=in_specs,
            out_specs=pl.BlockSpec((1, 1, LANES), lambda i, n_sref: (i, 0, 0)),
        ),
        compiler_params=pltpu.CompilerParams(
            dimension_semantics=("parallel",),
            vmem_limit_bytes=32 * 1024 * 1024),
        cost_estimate=pl.CostEstimate(
            flops=32 * rows * LANES,
            transcendentals=2 * rows * LANES,
            bytes_accessed=io_bytes),
    )(*args)

    # Valid per-box losses live in lane columns where lane % 4 == 0; the other
    # columns of the per-block partials are de-interleave byproducts.
    return jnp.sum(partials[:, :, 0::4])


def _iou_loss_ref(pred, target, weight=None, loc_loss_type='iou'):
    """Pure-JAX reference mirroring the PyTorch module."""
    p_l, p_t, p_r, p_b = pred[:, 0], pred[:, 1], pred[:, 2], pred[:, 3]
    t_l, t_t, t_r, t_b = target[:, 0], target[:, 1], target[:, 2], target[:, 3]
    target_area = (t_l + t_r) * (t_t + t_b)
    pred_area = (p_l + p_r) * (p_t + p_b)
    w_i = jnp.minimum(p_l, t_l) + jnp.minimum(p_r, t_r)
    h_i = jnp.minimum(p_b, t_b) + jnp.minimum(p_t, t_t)
    g_w = jnp.maximum(p_l, t_l) + jnp.maximum(p_r, t_r)
    g_h = jnp.maximum(p_b, t_b) + jnp.maximum(p_t, t_t)
    ac = g_w * g_h
    a_i = w_i * h_i
    a_u = target_area + pred_area - a_i
    ious = (a_i + 1.0) / (a_u + 1.0)
    gious = ious - (ac - a_u) / ac
    if loc_loss_type == 'iou':
        losses = -jnp.log(ious)
    elif loc_loss_type == 'linear_iou':
        losses = 1.0 - ious
    elif loc_loss_type == 'giou':
        losses = 1.0 - gious
    else:
        raise NotImplementedError(loc_loss_type)
    if weight is not None:
        return jnp.sum(losses * weight)
    return jnp.sum(losses)


if __name__ == "__main__":
    key = jax.random.PRNGKey(0)
    failures = []

    def check(n, loss_type, use_weight):
        k1, k2, k3 = jax.random.split(jax.random.fold_in(key, 97 * n + 7), 3)
        pred = jax.random.uniform(k1, (n, 4), jnp.float32, minval=0.1, maxval=5.0)
        target = jax.random.uniform(k2, (n, 4), jnp.float32, minval=0.1, maxval=5.0)
        w = (jax.random.uniform(k3, (n,), jnp.float32, minval=0.0, maxval=1.0)
             if use_weight else None)
        out = iou_loss(pred, target, w, loc_loss_type=loss_type)
        jax.block_until_ready(out)
        ref = _iou_loss_ref(pred, target, w, loc_loss_type=loss_type)
        if not jnp.allclose(out, ref, rtol=2e-4, atol=2e-4):
            failures.append((n, loss_type, use_weight, float(out), float(ref)))

    # small shapes consistent with the module (N boxes x 4 ltrb distances)
    for loss_type in ('iou', 'linear_iou', 'giou'):
        for use_weight in (False, True):
            check(8, loss_type, use_weight)
    check(200, 'giou', True)     # ragged tail (pad path), weighted
    check(1024, 'giou', False)   # zero-copy reshape, two exact blocks
    check(1056, 'iou', True)     # zero-copy reshape, partial final block

    if failures:
        for f in failures:
            print("MISMATCH n=%d type=%s weight=%s got=%.6f ref=%.6f" % f)
    else:
        print("KERNEL_OK")
</pallas_src>

<mosaic_0001>
module attributes {stable_mosaic.version = 11 : i64} {
  func.func @probe(%arg0: memref<1x128xf32, #tpu.memory_space<vmem>>, %arg1: memref<1x128xf32, #tpu.memory_space<vmem>>) attributes {dimension_semantics = [], scalar_prefetch = 0 : i64, scratch_operands = 0 : i64, tpu.core_type = #tpu.core_type<tc>} {
    %c0 = arith.constant 0 : index
    %c0_0 = arith.constant 0 : index
    %0 = vector.load %arg0[%c0, %c0_0] : memref<1x128xf32, #tpu.memory_space<vmem>>, vector<1x128xf32>
    %c126_i32 = arith.constant 126 : i32
    %1 = tpu.dynamic_rotate %0 by %c126_i32 dim 1 : vector<1x128xf32>, i32 -> vector<1x128xf32>
    %c0_1 = arith.constant 0 : index
    %c0_2 = arith.constant 0 : index
    %2 = vector.load %arg1[%c0_1, %c0_2] : memref<1x128xf32, #tpu.memory_space<vmem>>, vector<1x128xf32>
    tpu.vector_store %arg1[%c0_1, %c0_2], %1 {strides = array<i32>} : memref<1x128xf32, #tpu.memory_space<vmem>>, vector<1x128xf32>,
    return
  }
}

</mosaic_0001>

<llo_original>
// kernel: tpu_custom_call.1
$region0: #{tpu_custom_call.1}
  #allocation0 [shape = 'u32[]', space=smem, size = 0x4, offset = 0x4, fixed_abs, tag = 'smem constant byte address 0x4 - core index']
  #allocation1 [shape = 'u32[72,128]{1,0:T(1,128)}', space=vmem, size = 0x9000, scoped, tag = 'internal scratch']
  %s0 = inlined_call_operand.hbm [shape: f32[1,128], index: 0, kind: input, shape index: {}]
  %s1 = inlined_call_operand.hbm [shape: f32[1,128], index: 1, kind: output, shape index: {}]
  %s2 = sld [smem:[#allocation0]]
  $region18: #{tpu_custom_call.1} parent=0
    _
  %s4 = ssub.s32 1, %s2
  %s5 = scalar_select 0, %s4, %s2
  $region1: #{tpu_custom_call.1} parent=0
    #allocation2 [shape = 'u8[512]{0}', space=vmem, size = 0x400, scoped, tag = 'input window, operand 0, single buffered']
    #allocation3 [shape = 's32[1]{0}', space=sflag, size = 0x4, scoped, tag = 'scoped memory for tpu_custom_call.1']
    #allocation4 [shape = 's32[1]{0}', space=sflag, size = 0x4, scoped, tag = 'scoped memory for tpu_custom_call.1']
    #allocation5 [shape = 'u8[512]{0}', space=vmem, size = 0x400, scoped, tag = 'output window, operand 0, single buffered']
    %6 = vsyncpa [#allocation3], 0
    %7 = vsyncpa [#allocation4], 0
    // Predicated region
    $region2: #{tpu_custom_call.1} parent=1 // pred_check
      _
    $region3: #{tpu_custom_call.1} parent=1 // pred_check_branch
      %9 = sbr.rel (0) target = $region5
    $region4: #{tpu_custom_call.1} parent=1 // pred_region
      %11 = vsyncadd [#allocation3], 0
      %s13 = sshll.u32 %s0, 4
      %s14 = int_to_ptr.hbm [resolvable:$true] %s13
      %s15 = sshll.u32 [#allocation2], 4
      %s16 = int_to_ptr.vmem [resolvable:$true] %s15
      %18 = dma.hbm_to_vmem [thread:$0]  %s14, 16, %s16, [#allocation3]
    $region5: #{tpu_custom_call.1} parent=1 // pred_fallthru
      _
    // Predicated region
    $region6: #{tpu_custom_call.1} parent=1 // pred_check
      _
    $region7: #{tpu_custom_call.1} parent=1 // pred_check_branch
      %20 = sbr.rel (0) target = $region9
    $region8: #{tpu_custom_call.1} parent=1 // pred_region
      %22 = dma.done [#allocation3], 16
    $region9: #{tpu_custom_call.1} parent=1 // pred_fallthru
      _
    %v23 = vld [vmem:[#allocation2] sm:$0x1]
    %24 = vrot.lane.b32.xlu0 %v23, 126
    %v25 = vpop.permute.xlu0 %24
    %26 = vst [vmem:[#allocation5] sm:$0x1] %v25
    // Predicated region
    $region10: #{tpu_custom_call.1} parent=1 // pred_check
      _
    $region11: #{tpu_custom_call.1} parent=1 // pred_check_branch
      %28 = sbr.rel (0) target = $region13
    $region12: #{tpu_custom_call.1} parent=1 // pred_region
      %30 = vsyncadd [#allocation4], 0
      %s32 = sshll.u32 [#allocation5], 4
      %s33 = int_to_ptr.vmem [resolvable:$true] %s32
      %s34 = sshll.u32 %s1, 4
      %s35 = int_to_ptr.hbm [resolvable:$true] %s34
      %37 = dma.vmem_to_hbm [thread:$0]  %s33, 16, %s35, [#allocation4]
    $region13: #{tpu_custom_call.1} parent=1 // pred_fallthru
      _
    // Predicated region
    $region14: #{tpu_custom_call.1} parent=1 // pred_check
      _
    $region15: #{tpu_custom_call.1} parent=1 // pred_check_branch
      %39 = sbr.rel (0) target = $region17
    $region16: #{tpu_custom_call.1} parent=1 // pred_region
      %41 = dma.done [#allocation4], 16
    $region17: #{tpu_custom_call.1} parent=1 // pred_fallthru
      _
    %42 = vsyncpa [#allocation3], 1
    %43 = vsyncpa [#allocation4], 1

</llo_original>
